<compile_context>
chip_gen: v7x
topology: tpu7x:2x2x1
jax: 0.10.0
libtpu: 0.0.40
codegen_flags: <defaults>
</compile_context>

<pallas_src>
import functools

import jax
import jax.numpy as jnp
from jax import lax
from jax.experimental import pallas as pl
from jax.experimental.pallas import tpu as pltpu

SCALE_WEIGHT = 0.5 ** 0.5


# ---------------------------------------------------------------------------
# Hardware-aware sizing helpers.
# ---------------------------------------------------------------------------
@functools.lru_cache(maxsize=1)
def _vmem_capacity_bytes():
    """Physical VMEM per TensorCore (128 MiB on v5e/v6e, 64 MiB on v7x)."""
    try:
        info = pltpu.get_tpu_info()
        cap = int(getattr(info, "vmem_capacity_bytes", 0) or 0)
        if cap > 0:
            return cap
    except Exception:
        pass
    return 64 * 1024 * 1024          # conservative default (v7x per-TC VMEM)


def _vmem_limit_bytes(cap):
    """vmem_limit_bytes with headroom: ~51 MiB on 64 MiB parts, ~102 MiB on 128."""
    return int(min(max(cap * 4 // 5, 32 * 1024 * 1024), cap * 9 // 10))


def _round_up(x, m):
    return ((x + m - 1) // m) * m


def _divisors(n):
    out = set()
    i = 1
    while i * i <= n:
        if n % i == 0:
            out.add(i)
            out.add(n // i)
        i += 1
    return sorted(out)


def _pick_tile(m, per_row_bytes, fixed_bytes, budget, min_tiles=1):
    """Largest divisor of m that is a multiple of 8 (or m itself), fits the
    per-grid-step VMEM budget, and leaves at least `min_tiles` grid steps."""
    cap_rows = max(8, (budget - fixed_bytes) // max(per_row_bytes, 1))
    divs = _divisors(m)
    for t in sorted(divs, reverse=True):
        if (t % 8 == 0 or t == m) and t <= cap_rows and m // t >= min_tiles:
            return t
    for t in divs:                    # nothing fits the budget: smallest legal tile
        if t % 8 == 0:
            return t
    return m


# ---------------------------------------------------------------------------
# Parameter prep: torch Conv2d (2C, C, width, 1) -> fused per-tap (width, Cp, 2Cp)
# ---------------------------------------------------------------------------
def prep_gated_conv_params(weight, bias, compute_dtype=jnp.bfloat16, channel_pad=0):
    two_c, c, width, kw = weight.shape
    assert kw == 1 and two_c == 2 * c
    w_all = jnp.transpose(weight[..., 0], (2, 1, 0))      # (width, C, 2C)
    wo, wg = w_all[..., :c], w_all[..., c:]
    bo, bg = bias[:c], bias[c:]
    if channel_pad:
        p = channel_pad
        wo = jnp.pad(wo, ((0, 0), (0, p), (0, p)))
        wg = jnp.pad(wg, ((0, 0), (0, p), (0, p)))
        bo = jnp.pad(bo, (0, p))
        bg = jnp.pad(bg, (0, p))
    w_fused = jnp.concatenate([wo, wg], axis=-1).astype(compute_dtype)  # (width, Cp, 2Cp)
    b_fused = jnp.concatenate([bo, bg]).astype(jnp.float32).reshape(1, -1)
    return w_fused, b_fused


# ---------------------------------------------------------------------------
# Fully fused GLU: linear + all StackedCNN layers + final transpose, one call.
# grid = (batch, layer); activation resident in VMEM scratch across layers.
# ---------------------------------------------------------------------------
def _glu_fused_kernel(emb_ref, wl_ref, bl_ref, wc_ref, bc_ref, out_ref, act_ref,
                      *, width):
    layer = pl.program_id(1)
    pad = width // 2
    t_len, c_p = act_ref.shape

    @pl.when(layer == 0)
    def _():
        h = jnp.dot(emb_ref[...], wl_ref[...], preferred_element_type=jnp.float32)
        act_ref[...] = (h + bl_ref[...]).astype(act_ref.dtype)

    xc = act_ref[...]                                   # (T, Cp) bf16, aligned
    ridx = lax.broadcasted_iota(jnp.int32, (t_len, 1), 0)

    # All taps matmul the aligned xc; the row shift is applied to the f32 tap
    # result (XLU sublane roll) with zero 'same'-padding at the sequence ends.
    acc = jnp.dot(xc, wc_ref[pad], preferred_element_type=jnp.float32)   # (T, 2Cp)
    for d in range(1, pad + 1):
        z = jnp.dot(xc, wc_ref[pad - d], preferred_element_type=jnp.float32)
        acc = acc + jnp.where(ridx >= d, pltpu.roll(z, shift=d, axis=0), 0.0)
        z = jnp.dot(xc, wc_ref[pad + d], preferred_element_type=jnp.float32)
        acc = acc + jnp.where(ridx < t_len - d,
                              pltpu.roll(z, shift=t_len - d, axis=0), 0.0)

    y = acc + bc_ref[...]
    gated = y[:, :c_p] * jax.nn.sigmoid(y[:, c_p:])
    x_new = (xc.astype(jnp.float32) + gated) * SCALE_WEIGHT   # StackedCNN residual
    act_ref[...] = x_new.astype(act_ref.dtype)

    @pl.when(layer == pl.num_programs(1) - 1)
    def _():
        # Fused (T, Cp) -> (Cp, T) relayout: no standalone XLA transpose pass.
        out_ref[...] = jnp.transpose(x_new).astype(out_ref.dtype)


def _glu_fused(emb_c, wl, bl, w_stack, b_stack, *, width, vmem_limit):
    B, T, E = emb_c.shape
    Cp = wl.shape[1]
    num_layers = w_stack.shape[0]
    kernel = functools.partial(_glu_fused_kernel, width=width)
    return pl.pallas_call(
        kernel,
        out_shape=jax.ShapeDtypeStruct((B, Cp, T), jnp.float32),
        grid_spec=pltpu.PrefetchScalarGridSpec(
            num_scalar_prefetch=0,
            grid=(B, num_layers),
            in_specs=[
                pl.BlockSpec((None, T, E), lambda b, l: (b, 0, 0)),
                pl.BlockSpec((E, Cp), lambda b, l: (0, 0)),
                pl.BlockSpec((1, Cp), lambda b, l: (0, 0)),
                pl.BlockSpec((None, width, Cp, 2 * Cp), lambda b, l: (l, 0, 0, 0)),
                pl.BlockSpec((None, 1, 2 * Cp), lambda b, l: (l, 0, 0)),
            ],
            out_specs=pl.BlockSpec((None, Cp, T), lambda b, l: (b, 0, 0)),
            scratch_shapes=[pltpu.VMEM((T, Cp), emb_c.dtype)],
        ),
        compiler_params=pltpu.CompilerParams(
            dimension_semantics=("parallel", "arbitrary"),
            vmem_limit_bytes=vmem_limit),
    )(emb_c, wl, bl, w_stack, b_stack)


def _fused_fits(T, E, Cp, width, cap, compute_dtype):
    it = jnp.dtype(compute_dtype).itemsize
    act = T * Cp * it                                    # resident activation scratch
    io_blocks = 2 * (T * E * it + Cp * T * 4)            # emb in + f32 out, dbl-buffered
    weights = 2 * (E * Cp * it + width * Cp * 2 * Cp * it + 3 * Cp * 4)
    temps = 3 * T * 2 * Cp * 4 + 2 * T * Cp * it         # acc / rolled taps / selects
    need = act + io_blocks + weights + temps + (1 << 20)
    return need <= cap * 3 // 4


# ---------------------------------------------------------------------------
# Tiled fallback: Linear (emb_remap) kernel.
# ---------------------------------------------------------------------------
def _linear_kernel(x_ref, w_ref, b_ref, o_ref):
    acc = jnp.dot(x_ref[...], w_ref[...], preferred_element_type=jnp.float32)
    o_ref[...] = (acc + b_ref[...]).astype(o_ref.dtype)


def linear_pallas(x, w, b, *, out_dtype, cap=None):
    """x: (M, K), w: (K, N), b: (1, N) f32 -> (M, N) in out_dtype."""
    M, K = x.shape
    N = w.shape[1]
    cap = _vmem_capacity_bytes() if cap is None else cap
    budget = cap // 8
    fixed = 2 * K * N * w.dtype.itemsize + 2 * N * 4 + (1 << 16)
    per_row = 2 * K * x.dtype.itemsize + 2 * N * jnp.dtype(out_dtype).itemsize + 4 * N
    tm = _pick_tile(M, per_row, fixed, budget)
    return pl.pallas_call(
        _linear_kernel,
        out_shape=jax.ShapeDtypeStruct((M, N), out_dtype),
        grid_spec=pltpu.PrefetchScalarGridSpec(
            num_scalar_prefetch=0,
            grid=(M // tm,),
            in_specs=[
                pl.BlockSpec((tm, K), lambda i: (i, 0)),
                pl.BlockSpec((K, N), lambda i: (0, 0)),
                pl.BlockSpec((1, N), lambda i: (0, 0)),
            ],
            out_specs=pl.BlockSpec((tm, N), lambda i: (i, 0)),
        ),
        compiler_params=pltpu.CompilerParams(
            dimension_semantics=("parallel",),
            vmem_limit_bytes=_vmem_limit_bytes(cap)),
    )(x, w, b)


# ---------------------------------------------------------------------------
# Tiled fallback: one GatedConv layer on rows-last activations, with halos.
# ---------------------------------------------------------------------------
def _gated_conv_kernel(x_ref, halo_ref, w_ref, b_ref, o_ref, *, width, residual_scale):
    """One (batch, row-tile) step.  x_ref (tM, C); halo_ref (2*pad, C) = [lead; tail];
    w_ref (width, C, 2C) fused out|gate; b_ref (1, 2C) f32; o_ref (tM, C)."""
    tM, C = x_ref.shape
    pad = width // 2
    xc = x_ref[...]
    halo = halo_ref[...]
    ridx = lax.broadcasted_iota(jnp.int32, (tM, 1), 0)

    if pad == 1:
        # Aligned matmuls on xc only; the +/-1 row shift is applied to the f32
        # tap results (XLU roll), and the boundary rows take tiny halo matmuls
        # instead of a stitched (sublane-unaligned) input copy.
        z_l = jnp.dot(xc, w_ref[0], preferred_element_type=jnp.float32)
        acc = jnp.dot(xc, w_ref[1], preferred_element_type=jnp.float32)
        z_r = jnp.dot(xc, w_ref[2], preferred_element_type=jnp.float32)
        zh_l = jnp.dot(halo[0:1], w_ref[0], preferred_element_type=jnp.float32)
        zh_r = jnp.dot(halo[1:2], w_ref[2], preferred_element_type=jnp.float32)
        acc = acc + jnp.where(ridx >= 1, pltpu.roll(z_l, shift=1, axis=0), zh_l)
        acc = acc + jnp.where(ridx < tM - 1,
                              pltpu.roll(z_r, shift=tM - 1, axis=0), zh_r)
    else:
        # TODO(synk): general odd width uses a stitched halo tile (extra copies).
        x_all = jnp.concatenate([halo[0:pad], xc, halo[pad:]], axis=0)
        acc = jnp.dot(xc, w_ref[pad], preferred_element_type=jnp.float32)
        for k in range(width):
            if k == pad:
                continue
            acc = acc + jnp.dot(x_all[k:k + tM], w_ref[k],
                                preferred_element_type=jnp.float32)

    y = acc + b_ref[...]
    gated = y[:, :C] * jax.nn.sigmoid(y[:, C:])
    if residual_scale is not None:            # StackedCNN: x = (x + conv(x)) * SCALE
        gated = (xc.astype(jnp.float32) + gated) * residual_scale
    o_ref[...] = gated.astype(o_ref.dtype)


def gated_conv_rows(x, w_fused, b_fused, *, width=3, residual_scale=None,
                    row_tile=None, compute_dtype=jnp.bfloat16):
    """GatedConv on rows-last activations.  x: (B, L, C); w_fused (width, C, 2C);
    b_fused (1, 2C).  Returns (B, L, C) in compute_dtype."""
    B, L, C = x.shape
    assert width % 2 == 1 and width >= 3
    assert w_fused.shape == (width, C, 2 * C) and b_fused.shape == (1, 2 * C)
    pad = width // 2

    xc = x.astype(compute_dtype)
    wf = w_fused.astype(compute_dtype)
    bf = b_fused.astype(jnp.float32)

    cap = _vmem_capacity_bytes()
    if row_tile is not None:
        tM = row_tile
    else:
        budget = cap // 8                     # ~8 MiB/step on v7x, ~16 MiB on v5e/v6e
        fixed = (2 * width * C * 2 * C * wf.dtype.itemsize     # dbl-buffered weights
                 + 2 * 2 * pad * C * wf.dtype.itemsize + (1 << 16))
        per_row = 20 * C                      # x/out blocks (x2 bufs), f32 acc, temps
        # Prefer >= 2 row tiles when B == 1 so v7x's 2 TensorCores both get work.
        tM = _pick_tile(L, per_row, fixed, budget, min_tiles=2 if B < 2 else 1)
    assert L % tM == 0 and (tM % 8 == 0 or tM == L)
    Mt = L // tM

    # Halo side-arrays from static slices (no gather, no whole-tensor pad):
    # lead[m] = x rows [m*tM - pad, m*tM); tail[m] = rows [(m+1)*tM, (m+1)*tM + pad).
    xr = xc.reshape(B, Mt, tM, C)
    zpad = jnp.zeros((B, 1, pad, C), compute_dtype)
    lead = jnp.concatenate([zpad, xr[:, :-1, tM - pad:]], axis=1)
    tail = jnp.concatenate([xr[:, 1:, :pad], zpad], axis=1)
    halo = jnp.concatenate([lead, tail], axis=2)            # (B, Mt, 2*pad, C)

    kernel = functools.partial(_gated_conv_kernel, width=width,
                               residual_scale=residual_scale)
    return pl.pallas_call(
        kernel,
        out_shape=jax.ShapeDtypeStruct((B, L, C), compute_dtype),
        grid_spec=pltpu.PrefetchScalarGridSpec(
            num_scalar_prefetch=0,
            grid=(B, Mt),
            in_specs=[
                pl.BlockSpec((None, tM, C), lambda b, m: (b, m, 0)),
                pl.BlockSpec((None, None, 2 * pad, C), lambda b, m: (b, m, 0, 0)),
                pl.BlockSpec((width, C, 2 * C), lambda b, m: (0, 0, 0)),
                pl.BlockSpec((1, 2 * C), lambda b, m: (0, 0)),
            ],
            out_specs=pl.BlockSpec((None, tM, C), lambda b, m: (b, m, 0)),
        ),
        compiler_params=pltpu.CompilerParams(
            dimension_semantics=("parallel", "parallel"),
            vmem_limit_bytes=_vmem_limit_bytes(cap)),
    )(xc, halo, wf, bf)


# ---------------------------------------------------------------------------
# Full GLU forward.
# ---------------------------------------------------------------------------
@functools.partial(jax.jit, static_argnames=("width", "compute_dtype", "impl"))
def glu_forward(emb, params, *, width=3, compute_dtype=jnp.bfloat16, impl="auto"):
    """emb: (B, T, E) -> (B, hidden, T), matching GLU.forward (eval mode)."""
    # TODO(synk): dropout is a training-time stochastic op; eval-mode identity here.
    assert width % 2 == 1 and width >= 3, "only odd width >= 3 ('same' pad) is wired up"
    B, T, E = emb.shape
    w_lin, b_lin = params["linear"]                 # (hidden, E), (hidden,)
    C = w_lin.shape[0]
    layers = params["layers"]
    num_layers = len(layers)

    # Lane-aligned hidden size: every conv matmul's N is a multiple of 128, so
    # out/gate splits and output stores are full vregs.  Padded channels carry
    # exact zeros end-to-end, so the first C output channels are unchanged.
    Cp = _round_up(max(C, 128), 128)
    pc = Cp - C

    wl = jnp.transpose(w_lin)
    bl = b_lin
    if pc:
        wl = jnp.pad(wl, ((0, 0), (0, pc)))
        bl = jnp.pad(bl, (0, pc))
    wl = wl.astype(compute_dtype)                   # (E, Cp)
    bl = bl.astype(jnp.float32).reshape(1, Cp)

    w_conv, b_conv = [], []
    for (w_c, b_c) in layers:
        wf, bf = prep_gated_conv_params(w_c, b_c, compute_dtype, channel_pad=pc)
        w_conv.append(wf)
        b_conv.append(bf)

    cap = _vmem_capacity_bytes()
    emb_c = emb.astype(compute_dtype)

    use_fused = num_layers >= 1 and (
        impl == "fused"
        or (impl == "auto" and _fused_fits(T, E, Cp, width, cap, compute_dtype)))

    if use_fused:
        w_stack = jnp.stack(w_conv)                 # (num_layers, width, Cp, 2Cp)
        b_stack = jnp.stack(b_conv)                 # (num_layers, 1, 2Cp)
        out_p = _glu_fused(emb_c, wl, bl, w_stack, b_stack, width=width,
                           vmem_limit=_vmem_limit_bytes(cap))
    else:
        h = linear_pallas(emb_c.reshape(B * T, E), wl, bl,
                          out_dtype=compute_dtype, cap=cap)
        x = h.reshape(B, T, Cp)      # rows-last == _shape_transform's NCHW view
        for l in range(num_layers):
            x = gated_conv_rows(x, w_conv[l], b_conv[l], width=width,
                                residual_scale=SCALE_WEIGHT,
                                compute_dtype=compute_dtype)
        # TODO(synk): the fallback's final relayout is a separate XLA transpose
        #             pass; the fused path folds it into the last layer epilogue.
        out_p = jnp.transpose(x, (0, 2, 1)).astype(jnp.float32)

    return out_p[:, :C, :].astype(emb.dtype)        # (B, hidden, T)


# ---------------------------------------------------------------------------
# Pure-JAX references (mirroring the bf16-in / f32-accumulate policy).
# ---------------------------------------------------------------------------
def _gated_conv_ref(x, weight, bias, *, width):
    B, L, C = x.shape
    pad = width // 2
    x_nchw = jnp.transpose(x, (0, 2, 1))[..., None]             # (B, C, L, 1)
    y = lax.conv_general_dilated(
        x_nchw, weight.astype(x.dtype), (1, 1), ((pad, pad), (0, 0)),
        dimension_numbers=("NCHW", "OIHW", "NCHW"),
        preferred_element_type=jnp.float32)
    y = y + bias.reshape(1, -1, 1, 1).astype(jnp.float32)
    out = y[:, :C] * jax.nn.sigmoid(y[:, C:])
    return jnp.transpose(out[..., 0], (0, 2, 1))                # (B, L, C) f32


def _glu_ref(emb, params, *, width, compute_dtype=jnp.bfloat16):
    B, T, E = emb.shape
    w_lin, b_lin = params["linear"]
    h = jnp.dot(emb.reshape(B * T, E).astype(compute_dtype),
                jnp.transpose(w_lin).astype(compute_dtype),
                preferred_element_type=jnp.float32) + b_lin.astype(jnp.float32)
    x = h.astype(compute_dtype).reshape(B, T, -1)
    for w_c, b_c in params["layers"]:
        y = _gated_conv_ref(x, w_c, b_c, width=width)
        x = ((x.astype(jnp.float32) + y) * SCALE_WEIGHT).astype(compute_dtype)
    return jnp.transpose(x, (0, 2, 1)).astype(emb.dtype)


def init_glu_params(key, input_size, hidden_size, num_layers, width=3, dropout=0.2):
    """Synthetic init matching the module's parameter shapes / init scheme."""
    E, C = input_size, hidden_size
    keys = jax.random.split(key, 2 + 2 * num_layers)
    lim = 1.0 / (E ** 0.5)
    w_lin = jax.random.uniform(keys[0], (C, E), jnp.float32, -lim, lim)
    b_lin = jax.random.uniform(keys[1], (C,), jnp.float32, -lim, lim)
    fan_in, fan_out = C * width, 2 * C * width
    gain = (4.0 * (1.0 - dropout)) ** 0.5
    wb = gain * (6.0 / (fan_in + fan_out)) ** 0.5
    bb = 1.0 / (fan_in ** 0.5)
    layers = []
    for l in range(num_layers):
        w = jax.random.uniform(keys[2 + 2 * l], (2 * C, C, width, 1),
                               jnp.float32, -wb, wb)
        b = jax.random.uniform(keys[3 + 2 * l], (2 * C,), jnp.float32, -bb, bb)
        layers.append((w, b))
    return {"linear": (w_lin, b_lin), "layers": layers}


if __name__ == "__main__":
    key = jax.random.PRNGKey(0)
    k_emb, k_par, k_act = jax.random.split(key, 3)

    B, T, E, HID = 2, 16, 8, 32
    NUM_LAYERS, WIDTH, DROPOUT = 2, 3, 0.2

    emb = jax.random.normal(k_emb, (B, T, E), jnp.float32)
    params = init_glu_params(k_par, E, HID, NUM_LAYERS, WIDTH, DROPOUT)

    # (1) Unit check: one GatedConv layer (tiled kernel) vs lax.conv reference,
    #     with the auto tile and a forced multi-tile (exercises the halo path).
    x_act = jax.random.normal(k_act, (B, T, HID), jnp.float32).astype(jnp.bfloat16)
    w_c, b_c = params["layers"][0]
    wf, bf = prep_gated_conv_params(w_c, b_c)
    ref_layer = _gated_conv_ref(x_act, w_c, b_c, width=WIDTH)
    for rt in (None, 8):
        got = jax.block_until_ready(
            gated_conv_rows(x_act, wf, bf, width=WIDTH, residual_scale=None,
                            row_tile=rt))
        assert jnp.allclose(got.astype(jnp.float32), ref_layer,
                            atol=2e-2, rtol=2e-2), f"gated conv mismatch (tile={rt})"

    # (2) Full GLU forward: fused single-kernel path and tiled fallback path.
    ref = _glu_ref(emb, params, width=WIDTH)
    out_fused = jax.block_until_ready(glu_forward(emb, params, width=WIDTH))
    out_tiled = jax.block_until_ready(glu_forward(emb, params, width=WIDTH,
                                                  impl="tiled"))
    assert out_fused.shape == (B, HID, T), out_fused.shape
    assert out_tiled.shape == (B, HID, T), out_tiled.shape
    assert jnp.allclose(out_fused, ref, atol=5e-2, rtol=5e-2), "GLU (fused) mismatch"
    assert jnp.allclose(out_tiled, ref, atol=5e-2, rtol=5e-2), "GLU (tiled) mismatch"

    print("KERNEL_OK")
</pallas_src>

<mosaic_0001>
module attributes {stable_mosaic.version = 11 : i64} {
  func.func @_gated_conv_kernel(%arg0: i32, %arg1: i32, %arg2: memref<1x16x32xbf16, #tpu.memory_space<vmem>>, %arg3: memref<1x1x2x32xbf16, #tpu.memory_space<vmem>>, %arg4: memref<3x32x64xbf16, #tpu.memory_space<vmem>>, %arg5: memref<1x64xf32, #tpu.memory_space<vmem>>, %arg6: memref<1x16x32xbf16, #tpu.memory_space<vmem>>) attributes {dimension_semantics = [#tpu.dimension_semantics<parallel>, #tpu.dimension_semantics<parallel>], iteration_bounds = array<i64: 2, 1>, scalar_prefetch = 0 : i64, scratch_operands = 0 : i64, tpu.core_type = #tpu.core_type<tc>, window_params = [{transform_indices = @transform_0, window_bounds = array<i64: 1, 16, 32>}, {transform_indices = @transform_1, window_bounds = array<i64: 1, 1, 2, 32>}, {pipeline_mode = #tpu.pipeline_mode<synchronous>, transform_indices = @transform_2, window_bounds = array<i64: 3, 32, 64>}, {pipeline_mode = #tpu.pipeline_mode<synchronous>, transform_indices = @transform_3, window_bounds = array<i64: 1, 64>}, {transform_indices = @transform_4, window_bounds = array<i64: 1, 16, 32>}]} {
    %c0 = arith.constant 0 : index
    %c0_0 = arith.constant 0 : index
    %c0_1 = arith.constant 0 : index
    %0 = vector.load %arg2[%c0, %c0_0, %c0_1] : memref<1x16x32xbf16, #tpu.memory_space<vmem>>, vector<1x16x32xbf16>
    %1 = vector.shape_cast %0 : vector<1x16x32xbf16> to vector<16x32xbf16>
    %c0_2 = arith.constant 0 : index
    %c0_3 = arith.constant 0 : index
    %c0_4 = arith.constant 0 : index
    %c0_5 = arith.constant 0 : index
    %2 = vector.load %arg3[%c0_2, %c0_3, %c0_4, %c0_5] : memref<1x1x2x32xbf16, #tpu.memory_space<vmem>>, vector<1x1x2x32xbf16>
    %3 = vector.shape_cast %2 : vector<1x1x2x32xbf16> to vector<2x32xbf16>
    %4 = tpu.iota {dimensions = array<i32: 0>} : vector<16x1xi32>
    %c0_6 = arith.constant 0 : index
    %c0_7 = arith.constant 0 : index
    %c0_8 = arith.constant 0 : index
    %5 = vector.load %arg4[%c0_6, %c0_7, %c0_8] : memref<3x32x64xbf16, #tpu.memory_space<vmem>>, vector<1x32x64xbf16>
    %6 = vector.shape_cast %5 : vector<1x32x64xbf16> to vector<32x64xbf16>
    %cst = arith.constant dense<0.000000e+00> : vector<16x64xf32>
    %7 = tpu.matmul %1, %6, %cst {dimension_numbers = #tpu.dot_dimension_numbers<[1], [0], [0], [1], [0, 0, 1, 1], [], []>} : vector<16x32xbf16>, vector<32x64xbf16>, vector<16x64xf32> -> vector<16x64xf32>
    %c1 = arith.constant 1 : index
    %c0_9 = arith.constant 0 : index
    %c0_10 = arith.constant 0 : index
    %8 = vector.load %arg4[%c1, %c0_9, %c0_10] : memref<3x32x64xbf16, #tpu.memory_space<vmem>>, vector<1x32x64xbf16>
    %9 = vector.shape_cast %8 : vector<1x32x64xbf16> to vector<32x64xbf16>
    %cst_11 = arith.constant dense<0.000000e+00> : vector<16x64xf32>
    %10 = tpu.matmul %1, %9, %cst_11 {dimension_numbers = #tpu.dot_dimension_numbers<[1], [0], [0], [1], [0, 0, 1, 1], [], []>} : vector<16x32xbf16>, vector<32x64xbf16>, vector<16x64xf32> -> vector<16x64xf32>
    %c2 = arith.constant 2 : index
    %c0_12 = arith.constant 0 : index
    %c0_13 = arith.constant 0 : index
    %11 = vector.load %arg4[%c2, %c0_12, %c0_13] : memref<3x32x64xbf16, #tpu.memory_space<vmem>>, vector<1x32x64xbf16>
    %12 = vector.shape_cast %11 : vector<1x32x64xbf16> to vector<32x64xbf16>
    %cst_14 = arith.constant dense<0.000000e+00> : vector<16x64xf32>
    %13 = tpu.matmul %1, %12, %cst_14 {dimension_numbers = #tpu.dot_dimension_numbers<[1], [0], [0], [1], [0, 0, 1, 1], [], []>} : vector<16x32xbf16>, vector<32x64xbf16>, vector<16x64xf32> -> vector<16x64xf32>
    %14 = vector.extract_strided_slice %3 {offsets = [0, 0], sizes = [1, 32], strides = [1, 1]} : vector<2x32xbf16> to vector<1x32xbf16>
    %c0_15 = arith.constant 0 : index
    %c0_16 = arith.constant 0 : index
    %c0_17 = arith.constant 0 : index
    %15 = vector.load %arg4[%c0_15, %c0_16, %c0_17] : memref<3x32x64xbf16, #tpu.memory_space<vmem>>, vector<1x32x64xbf16>
    %16 = vector.shape_cast %15 : vector<1x32x64xbf16> to vector<32x64xbf16>
    %cst_18 = arith.constant dense<0.000000e+00> : vector<1x64xf32>
    %17 = tpu.matmul %14, %16, %cst_18 {dimension_numbers = #tpu.dot_dimension_numbers<[1], [0], [0], [1], [0, 0, 1, 1], [], []>} : vector<1x32xbf16>, vector<32x64xbf16>, vector<1x64xf32> -> vector<1x64xf32>
    %18 = vector.extract_strided_slice %3 {offsets = [1, 0], sizes = [1, 32], strides = [1, 1]} : vector<2x32xbf16> to vector<1x32xbf16>
    %c2_19 = arith.constant 2 : index
    %c0_20 = arith.constant 0 : index
    %c0_21 = arith.constant 0 : index
    %19 = vector.load %arg4[%c2_19, %c0_20, %c0_21] : memref<3x32x64xbf16, #tpu.memory_space<vmem>>, vector<1x32x64xbf16>
    %20 = vector.shape_cast %19 : vector<1x32x64xbf16> to vector<32x64xbf16>
    %cst_22 = arith.constant dense<0.000000e+00> : vector<1x64xf32>
    %21 = tpu.matmul %18, %20, %cst_22 {dimension_numbers = #tpu.dot_dimension_numbers<[1], [0], [0], [1], [0, 0, 1, 1], [], []>} : vector<1x32xbf16>, vector<32x64xbf16>, vector<1x64xf32> -> vector<1x64xf32>
    %c1_i32 = arith.constant 1 : i32
    %22 = vector.broadcast %c1_i32 : i32 to vector<16x1xi32>
    %23 = arith.cmpi sge, %4, %22 : vector<16x1xi32>
    %c1_i32_23 = arith.constant 1 : i32
    %24 = tpu.dynamic_rotate %7 by %c1_i32_23 dim 0 : vector<16x64xf32>, i32 -> vector<16x64xf32>
    %25 = vector.shape_cast %23 : vector<16x1xi1> to vector<16x1xi1>
    %26 = vector.broadcast %25 : vector<16x1xi1> to vector<16x64xi1>
    %27 = vector.shape_cast %17 : vector<1x64xf32> to vector<1x64xf32>
    %28 = vector.broadcast %27 : vector<1x64xf32> to vector<16x64xf32>
    %29 = arith.select %26, %24, %28 : vector<16x64xi1>, vector<16x64xf32>
    %30 = arith.addf %10, %29 : vector<16x64xf32>
    %c15_i32 = arith.constant 15 : i32
    %31 = vector.broadcast %c15_i32 : i32 to vector<16x1xi32>
    %32 = arith.cmpi slt, %4, %31 : vector<16x1xi32>
    %c15_i32_24 = arith.constant 15 : i32
    %33 = tpu.dynamic_rotate %13 by %c15_i32_24 dim 0 : vector<16x64xf32>, i32 -> vector<16x64xf32>
    %34 = vector.shape_cast %32 : vector<16x1xi1> to vector<16x1xi1>
    %35 = vector.broadcast %34 : vector<16x1xi1> to vector<16x64xi1>
    %36 = vector.shape_cast %21 : vector<1x64xf32> to vector<1x64xf32>
    %37 = vector.broadcast %36 : vector<1x64xf32> to vector<16x64xf32>
    %38 = arith.select %35, %33, %37 : vector<16x64xi1>, vector<16x64xf32>
    %39 = arith.addf %30, %38 : vector<16x64xf32>
    %c0_25 = arith.constant 0 : index
    %c0_26 = arith.constant 0 : index
    %40 = vector.load %arg5[%c0_25, %c0_26] : memref<1x64xf32, #tpu.memory_space<vmem>>, vector<1x64xf32>
    %41 = vector.broadcast %40 : vector<1x64xf32> to vector<16x64xf32>
    %42 = arith.addf %39, %41 : vector<16x64xf32>
    %43 = vector.extract_strided_slice %42 {offsets = [0, 0], sizes = [16, 32], strides = [1, 1]} : vector<16x64xf32> to vector<16x32xf32>
    %44 = vector.extract_strided_slice %42 {offsets = [0, 32], sizes = [16, 32], strides = [1, 1]} : vector<16x64xf32> to vector<16x32xf32>
    %45 = arith.negf %44 : vector<16x32xf32>
    %46 = math.exp %45 : vector<16x32xf32>
    %cst_27 = arith.constant 1.000000e+00 : f32
    %47 = vector.broadcast %cst_27 : f32 to vector<16x32xf32>
    %48 = arith.addf %47, %46 : vector<16x32xf32>
    %49 = arith.divf %47, %48 : vector<16x32xf32>
    %50 = arith.mulf %43, %49 : vector<16x32xf32>
    %51 = arith.truncf %50 : vector<16x32xf32> to vector<16x32xbf16>
    %c0_28 = arith.constant 0 : index
    %c0_29 = arith.constant 0 : index
    %c0_30 = arith.constant 0 : index
    %52 = vector.load %arg6[%c0_28, %c0_29, %c0_30] : memref<1x16x32xbf16, #tpu.memory_space<vmem>>, vector<1x16x32xbf16>
    %53 = vector.shape_cast %52 : vector<1x16x32xbf16> to vector<16x32xbf16>
    %54 = vector.shape_cast %51 : vector<16x32xbf16> to vector<1x16x32xbf16>
    tpu.vector_store %arg6[%c0_28, %c0_29, %c0_30], %54 {strides = array<i32>} : memref<1x16x32xbf16, #tpu.memory_space<vmem>>, vector<1x16x32xbf16>,
    return
  }
  func.func @transform_0(%arg0: i32, %arg1: i32) -> (i32, i32, i32) {
    %c0_i32 = arith.constant 0 : i32
    %c0_i32_0 = arith.constant 0 : i32
    return %arg0, %arg1, %c0_i32 : i32, i32, i32
  }
  func.func @transform_1(%arg0: i32, %arg1: i32) -> (i32, i32, i32, i32) {
    %c0_i32 = arith.constant 0 : i32
    %c0_i32_0 = arith.constant 0 : i32
    %c0_i32_1 = arith.constant 0 : i32
    return %arg0, %arg1, %c0_i32, %c0_i32_0 : i32, i32, i32, i32
  }
  func.func @transform_2(%arg0: i32, %arg1: i32) -> (i32, i32, i32) {
    %c0_i32 = arith.constant 0 : i32
    %c0_i32_0 = arith.constant 0 : i32
    %c0_i32_1 = arith.constant 0 : i32
    %c0_i32_2 = arith.constant 0 : i32
    return %c0_i32, %c0_i32_0, %c0_i32_1 : i32, i32, i32
  }
  func.func @transform_3(%arg0: i32, %arg1: i32) -> (i32, i32) {
    %c0_i32 = arith.constant 0 : i32
    %c0_i32_0 = arith.constant 0 : i32
    %c0_i32_1 = arith.constant 0 : i32
    return %c0_i32, %c0_i32_0 : i32, i32
  }
  func.func @transform_4(%arg0: i32, %arg1: i32) -> (i32, i32, i32) {
    %c0_i32 = arith.constant 0 : i32
    %c0_i32_0 = arith.constant 0 : i32
    return %arg0, %arg1, %c0_i32 : i32, i32, i32
  }
}

</mosaic_0001>

<llo_original>
// kernel: tpu_custom_call.1
$region0: #{tpu_custom_call.1}
  #allocation0 [shape = 'u32[]', space=smem, size = 0x4, offset = 0x4, fixed_abs, tag = 'smem constant byte address 0x4 - core index']
  #allocation1 [shape = 'u32[144,128]{1,0:T(1,128)}', space=vmem, size = 0x12000, scoped, tag = 'internal scratch']
  %s0 = inlined_call_operand.hbm [shape: bf16[2,16,32], index: 0, kind: input, shape index: {}]
  %s1 = inlined_call_operand.vmem [shape: bf16[2,1,2,32], index: 1, kind: input, shape index: {}]
  %s2 = inlined_call_operand.hbm [shape: bf16[3,32,64], index: 2, kind: input, shape index: {}]
  %s3 = inlined_call_operand.vmem [shape: f32[1,64], index: 3, kind: input, shape index: {}]
  %s4 = inlined_call_operand.hbm [shape: bf16[2,16,32], index: 4, kind: output, shape index: {}]
  %s5 = sld [smem:[#allocation0]]
  $region57: #{tpu_custom_call.1} parent=0
    _
  %s7 = ssub.s32 1, %s5
  %s8 = scalar_select 0, %s7, %s5
  $region1: #{tpu_custom_call.1} parent=0
    #allocation2 [shape = 'u8[8192]{0}', space=vmem, size = 0x2000, scoped, tag = 'input window, operand 0']
    #allocation3 [shape = 's32[2]{0}', space=sflag, size = 0x8, scoped, tag = 'scoped memory for tpu_custom_call.1']
    #allocation4 [shape = 's32[2]{0}', space=sflag, size = 0x8, scoped, tag = 'scoped memory for tpu_custom_call.1']
    #allocation5 [shape = 'u8[24576]{0}', space=vmem, size = 0x6000, scoped, tag = 'input window, operand 2, single buffered']
    #allocation6 [shape = 's32[1]{0}', space=sflag, size = 0x4, scoped, tag = 'scoped memory for tpu_custom_call.1']
    #allocation7 [shape = 'u8[8192]{0}', space=vmem, size = 0x2000, scoped, tag = 'output window, operand 0']
    %9 = vsyncpa [#allocation3], 0
    %s10 = scalar_lea.sflag [#allocation3], 1
    %11 = vsyncpa %s10, 0
    %12 = vsyncpa [#allocation6], 0
    %13 = vsyncpa [#allocation4], 0
    %s14 = scalar_lea.sflag [#allocation4], 1
    %15 = vsyncpa %s14, 0
    loop: start=0, step=1, limit=4
    $region2: #{tpu_custom_call.1} parent=1 // loop_pre_header
      _
    $region3: #{tpu_custom_call.1} parent=1 // loop_header
      %s17 = sphi 0, %s21
      %p18 = scmp.ge.s32.totalorder %s17, 4
      %s24 = sphi 0, %s36
      %s25 = sphi 0, %s32
      %s26 = sphi 0, %s24
      %s27 = sphi 0, %s25
      %s28 = sphi 0, %s26
      %s29 = sphi 0, %s27
      %s41 = sphi 0, %s43
      %s44 = sphi 0, %s41
      %s45 = sphi 0, %s44
      %s61 = sphi 0, %s45
      %s69 = sphi 0, %s71
      %s72 = sphi 0, %s69
      %s73 = sphi 0, %s72
      %s89 = sphi 0, %s73
      %s93 = sphi 0, %s93
      %s95 = sphi 0, %s93
      %s96 = sphi 0, %s95
      %s110 = sphi 0, %s96
      %s114 = sphi 0, %s114
      %s116 = sphi 0, %s114
      %s117 = sphi 0, %s116
      %s131 = sphi 0, %s117
      %s139 = sphi 0, %s141
      %s142 = sphi 0, %s139
      %s143 = sphi 0, %s142
      %s159 = sphi 0, %s143
    $region4: #{tpu_custom_call.1} parent=1 // loop_header_branch
      %20 = sbr.rel (%p18) target = $region8
    $region5: #{tpu_custom_call.1} parent=1 // loop_body
      %s22 = ssub.s32 %s17, 1
      %s23 = ssub.s32 %s17, 2
      %s30 = sadd.s32 1, %s25
      %p31 = scmp.ge.s32.totalorder %s30, 1
      %s32 = scalar_select %p31, 0, %s30
      %s33 = sadd.s32 1, %s24
      %s34 = scalar_select %p31, %s33, %s24
      %p35 = scmp.ge.s32.totalorder %s34, 2
      %s36 = scalar_select %p35, 0, %s34
      %s37 = ssub.s32 %s24, %s36
      %s38 = ssub.s32 %s25, %s32
      %s39 = sor.u32 %s37, %s38
      %p40 = scmp.eq.s32.totalorder %s39, 0
      %s42 = sadd.s32 %s41, 1
      %s43 = scalar_select %p40, %s41, %s42
      %p46 = pneg %p40
      %p47 = scmp.eq.s32.totalorder %s17, 1
      %p48 = por %p46, %p47
      %p49 = scmp.ne.s32.totalorder %s41, %s44
      %p50 = scmp.eq.s32.totalorder %s17, 0
      %p51 = por %p49, %p50
      %p52 = scmp.ne.s32.totalorder %s41, %s44
      %p53 = scmp.eq.s32.totalorder %s22, 1
      %p54 = por %p52, %p53
      %p55 = scmp.ne.s32.totalorder %s44, %s45
      %p56 = scmp.eq.s32.totalorder %s22, 0
      %p57 = por %p55, %p56
      %p58 = scmp.ne.s32.totalorder %s44, %s45
      %p59 = scmp.eq.s32.totalorder %s23, 1
      %p60 = por %p58, %p59
      %p62 = scmp.ne.s32.totalorder %s45, %s61
      %p63 = scmp.eq.s32.totalorder %s23, 0
      %p64 = por %p62, %p63
      %s65 = ssub.s32 %s24, %s36
      %s66 = ssub.s32 %s25, %s32
      %s67 = sor.u32 %s65, %s66
      %p68 = scmp.eq.s32.totalorder %s67, 0
      %s70 = sadd.s32 %s69, 1
      %s71 = scalar_select %p68, %s69, %s70
      %p74 = pneg %p68
      %p75 = scmp.eq.s32.totalorder %s17, 1
      %p76 = por %p74, %p75
      %p77 = scmp.ne.s32.totalorder %s69, %s72
      %p78 = scmp.eq.s32.totalorder %s17, 0
      %p79 = por %p77, %p78
      %p80 = scmp.ne.s32.totalorder %s69, %s72
      %p81 = scmp.eq.s32.totalorder %s22, 1
      %p82 = por %p80, %p81
      %p83 = scmp.ne.s32.totalorder %s72, %s73
      %p84 = scmp.eq.s32.totalorder %s22, 0
      %p85 = por %p83, %p84
      %p86 = scmp.ne.s32.totalorder %s72, %s73
      %p87 = scmp.eq.s32.totalorder %s23, 1
      %p88 = por %p86, %p87
      %p90 = scmp.ne.s32.totalorder %s73, %s89
      %p91 = scmp.eq.s32.totalorder %s23, 0
      %p92 = por %p90, %p91
      %s94 = sadd.s32 %s93, 1
      %p97 = scmp.eq.s32.totalorder %s17, 1
      %p98 = scmp.ne.s32.totalorder %s93, %s95
      %p99 = scmp.eq.s32.totalorder %s17, 0
      %p100 = por %p98, %p99
      %p101 = scmp.ne.s32.totalorder %s93, %s95
      %p102 = scmp.eq.s32.totalorder %s22, 1
      %p103 = por %p101, %p102
      %p104 = scmp.ne.s32.totalorder %s95, %s96
      %p105 = scmp.eq.s32.totalorder %s22, 0
      %p106 = por %p104, %p105
      %p107 = scmp.ne.s32.totalorder %s95, %s96
      %p108 = scmp.eq.s32.totalorder %s23, 1
      %p109 = por %p107, %p108
      %p111 = scmp.ne.s32.totalorder %s96, %s110
      %p112 = scmp.eq.s32.totalorder %s23, 0
      %p113 = por %p111, %p112
      %s115 = sadd.s32 %s114, 1
      %p118 = scmp.eq.s32.totalorder %s17, 1
      %p119 = scmp.ne.s32.totalorder %s114, %s116
      %p120 = scmp.eq.s32.totalorder %s17, 0
      %p121 = por %p119, %p120
      %p122 = scmp.ne.s32.totalorder %s114, %s116
      %p123 = scmp.eq.s32.totalorder %s22, 1
      %p124 = por %p122, %p123
      %p125 = scmp.ne.s32.totalorder %s116, %s117
      %p126 = scmp.eq.s32.totalorder %s22, 0
      %p127 = por %p125, %p126
      %p128 = scmp.ne.s32.totalorder %s116, %s117
      %p129 = scmp.eq.s32.totalorder %s23, 1
      %p130 = por %p128, %p129
      %p132 = scmp.ne.s32.totalorder %s117, %s131
      %p133 = scmp.eq.s32.totalorder %s23, 0
      %p134 = por %p132, %p133
      %s135 = ssub.s32 %s24, %s36
      %s136 = ssub.s32 %s25, %s32
      %s137 = sor.u32 %s135, %s136
      %p138 = scmp.eq.s32.totalorder %s137, 0
      %s140 = sadd.s32 %s139, 1
      %s141 = scalar_select %p138, %s139, %s140
      %p144 = pneg %p138
      %p145 = scmp.eq.s32.totalorder %s17, 1
      %p146 = por %p144, %p145
      %p147 = scmp.ne.s32.totalorder %s139, %s142
      %p148 = scmp.eq.s32.totalorder %s17, 0
      %p149 = por %p147, %p148
      %p150 = scmp.ne.s32.totalorder %s139, %s142
      %p151 = scmp.eq.s32.totalorder %s22, 1
      %p152 = por %p150, %p151
      %p153 = scmp.ne.s32.totalorder %s142, %s143
      %p154 = scmp.eq.s32.totalorder %s22, 0
      %p155 = por %p153, %p154
      %p156 = scmp.ne.s32.totalorder %s142, %s143
      %p157 = scmp.eq.s32.totalorder %s23, 1
      %p158 = por %p156, %p157
      %p160 = scmp.ne.s32.totalorder %s143, %s159
      %p161 = scmp.eq.s32.totalorder %s23, 0
      %p162 = por %p160, %p161
      %p163 = scmp.le.s32.totalorder 1, %s17
      %p164 = scmp.lt.s32.totalorder %s17, 3
      %p165 = pnand %p163, %p164
      %p166 = pneg %p165
      // Predicated region
      $region9: #{tpu_custom_call.1} parent=5 // pred_check
        _
      $region10: #{tpu_custom_call.1} parent=5 // pred_check_branch
        %168 = sbr.rel (%p165) target = $region12
      $region11: #{tpu_custom_call.1} parent=5 // pred_region
        %s169 = ssub.s32 %s17, 1
        // Predicated region
        $region13: #{tpu_custom_call.1} parent=11 // pred_check
          %p170 = pneg %p106
        $region14: #{tpu_custom_call.1} parent=11 // pred_check_branch
          %172 = sbr.rel (%p170) target = $region16
        $region15: #{tpu_custom_call.1} parent=11 // pred_region
          %s174 = ssub.s32 768, 768
          %175 = vsyncadd [#allocation6], %s174
          %s176 = sshll.u32 [#allocation5], 4
          %s177 = int_to_ptr.vmem [resolvable:$true] %s176
          %182 = dma.hbm_to_vmem [thread:$0]  %s2, 768, %s177, [#allocation6], 64, 64, 4
        $region16: #{tpu_custom_call.1} parent=11 // pred_fallthru
          _
        // Predicated region
        $region17: #{tpu_custom_call.1} parent=11 // pred_check
          %p183 = pneg %p127
        $region18: #{tpu_custom_call.1} parent=11 // pred_check_branch
          %185 = sbr.rel (%p183) target = $region20
        $region19: #{tpu_custom_call.1} parent=11 // pred_region
          _
        $region20: #{tpu_custom_call.1} parent=11 // pred_fallthru
          _
      $region12: #{tpu_custom_call.1} parent=5 // pred_fallthru
        _
      %p186 = scmp.lt.s32.totalorder %s17, 2
      // Predicated region
      $region21: #{tpu_custom_call.1} parent=5 // pred_check
        %p187 = pneg %p186
      $region22: #{tpu_custom_call.1} parent=5 // pred_check_branch
        %189 = sbr.rel (%p187) target = $region24
      $region23: #{tpu_custom_call.1} parent=5 // pred_region
        // Predicated region
        $region25: #{tpu_custom_call.1} parent=23 // pred_check
          %p190 = pneg %p51
        $region26: #{tpu_custom_call.1} parent=23 // pred_check_branch
          %192 = sbr.rel (%p190) target = $region28
        $region27: #{tpu_custom_call.1} parent=23 // pred_region
          %s193 = sand.u32 %s41, 1
          %s194 = scalar_lea.sflag [#allocation3], %s193
          %s195 = sand.u32 %s41, 1
          %s196 = smul.addr %s195, 8
          %s197 = scalar_lea.vmem [#allocation2], %s196
          %s198 = smul.u32 2, %s25
          %s200 = ssub.s32 128, 128
          %201 = vsyncadd %s194, %s200
          %s202 = smul.addr %s24, 2
          %s203 = sadd.s32 %s198, %s202
          %s204 = smul.addr %s203, 64
          %s205 = scalar_lea.hbm %s0, %s204
          %s206 = sshll.u32 %s197, 4
          %s207 = int_to_ptr.vmem [resolvable:$true] %s206
          %212 = dma.hbm_to_vmem [thread:$0]  %s205, 128, %s207, %s194, 64, 64, 4
        $region28: #{tpu_custom_call.1} parent=23 // pred_fallthru
          _
        // Predicated region
        $region29: #{tpu_custom_call.1} parent=23 // pred_check
          %p213 = pneg %p79
        $region30: #{tpu_custom_call.1} parent=23 // pred_check_branch
          %215 = sbr.rel (%p213) target = $region32
        $region31: #{tpu_custom_call.1} parent=23 // pred_region
          %p216 = scmp.lt.s32.totalorder %s24, 1
          %s217 = scalar_select %p216, %s24, 1
          %p218 = scmp.lt.s32.totalorder %s25, 0
          %s219 = scalar_select %p218, %s25, 0
          %s220 = sadd.s32 %s219, %s217
          %s221 = scalar_lea.vmem %s1, %s220
        $region32: #{tpu_custom_call.1} parent=23 // pred_fallthru
          _
      $region24: #{tpu_custom_call.1} parent=5 // pred_fallthru
        _
      %p222 = scmp.le.s32.totalorder 1, %s17
      %p223 = scmp.lt.s32.totalorder %s17, 3
      %p224 = pnand %p222, %p223
      %p225 = pneg %p224
      // Predicated region
      $region33: #{tpu_custom_call.1} parent=5 // pred_check
        _
      $region34: #{tpu_custom_call.1} parent=5 // pred_check_branch
        %227 = sbr.rel (%p224) target = $region36
      $region35: #{tpu_custom_call.1} parent=5 // pred_region
        %s228 = ssub.s32 %s17, 1
        %s229 = sand.u32 %s44, 1
        %s230 = scalar_lea.sflag [#allocation3], %s229
        %s231 = sand.u32 %s44, 1
        %s232 = smul.addr %s231, 8
        %s233 = scalar_lea.vmem [#allocation2], %s232
        // Predicated region
        $region37: #{tpu_custom_call.1} parent=35 // pred_check
          %p234 = pneg %p57
        $region38: #{tpu_custom_call.1} parent=35 // pred_check_branch
          %236 = sbr.rel (%p234) target = $region40
        $region39: #{tpu_custom_call.1} parent=35 // pred_region
          %237 = dma.done %s230, 128
        $region40: #{tpu_custom_call.1} parent=35 // pred_fallthru
          _
        // Predicated region
        $region41: #{tpu_custom_call.1} parent=35 // pred_check
          %p238 = pneg %p106
        $region42: #{tpu_custom_call.1} parent=35 // pred_check_branch
          %240 = sbr.rel (%p238) target = $region44
        $region43: #{tpu_custom_call.1} parent=35 // pred_region
          %241 = dma.done [#allocation6], 768
        $region44: #{tpu_custom_call.1} parent=35 // pred_fallthru
          _
        %s242 = sand.u32 %s44, 1
        %s243 = scalar_lea.sflag [#allocation3], %s242
        %s244 = sand.u32 %s44, 1
        %s245 = smul.addr %s244, 8
        %s246 = scalar_lea.vmem [#allocation2], %s245
        %p247 = pneg %p57
        %p248 = pneg %p54
        %p249 = scmp.lt.s32.totalorder %s26, 1
        %s250 = scalar_select %p249, %s26, 1
        %p251 = scmp.lt.s32.totalorder %s27, 0
        %s252 = scalar_select %p251, %s27, 0
        %s253 = sadd.s32 %s252, %s250
        %s254 = scalar_lea.vmem %s1, %s253
        %p255 = pneg %p85
        %p256 = pneg %p82
        %p257 = pneg %p106
        %p258 = pneg %p103
        %p259 = pneg %p127
        %p260 = pneg %p124
        %p261 = pneg %p155
        %p262 = pneg %p152
        %s263 = sand.u32 %s142, 1
        %s264 = scalar_lea.sflag [#allocation4], %s263
        %s265 = sand.u32 %s142, 1
        %s266 = smul.addr %s265, 8
        %s267 = scalar_lea.vmem [#allocation7], %s266
        %s268 = smul.u32 2, %s27
        %p269 = scmp.lt.s32.totalorder %s26, 1
        %s270 = scalar_select %p269, %s26, 1
        %p271 = scmp.lt.s32.totalorder %s27, 0
        %s272 = scalar_select %p271, %s27, 0
        %s273 = sadd.s32 %s272, %s270
        %s274 = scalar_lea.vmem %s1, %s273
        %s275 = smul.u32 2, %s27
        %v277 = vld [vmem:[%s233] sm:$0xf]
        %v278 = vld [vmem:[%s233 + $0x4] sm:$0xf]
        %v279 = vld [vmem:[%s274] sm:$0x1]
        %v280 = vlaneseq
        %v281 = vshrl.u32 %v280, 7
        %v282 = vadd.s32 %v281, 8
        %v283 = vld [vmem:[#allocation5] sm:$0xf]
        %v284 = vld [vmem:[#allocation5 + $0x4] sm:$0xf]
        %v285 = vld [vmem:[#allocation5 + $0x8] sm:$0xf]
        %v286 = vld [vmem:[#allocation5 + $0xc] sm:$0xf]
        %v289 = vunpack.c.l.b16 %v277
        %v290 = vunpack.c.l.b16 %v278
        %v291 = vpack.c.b16 %v290, %v289
        %v296 = vunpack.c.l.b16 %v283
        %v297 = vunpack.c.l.b16 %v284
        %v298 = vunpack.c.l.b16 %v285
        %v299 = vunpack.c.l.b16 %v286
        %v300 = vpack.c.b16 %v297, %v296
        %v301 = vpack.c.b16 %v299, %v298
        %vm304 = vcmask 261120
        %v306 = vsel %vm304, %v291, 0
        %308 = vmatprep.subr.bf16.mxu0 0
        %309 = vmatpush1.bf16.msra.mxu0 %v300
        %310 = vmatprep.subr.bf16.mxu0 0
        %311 = vmatpush1.bf16.msra.mxu0 %v301
        %312 = vmatprep.subr.bf16.mxu0 0
        %313 = vmatpush1.bf16.msra.mxu0 0
        %314 = vmatprep.subr.bf16.mxu0 0
        %315 = vmatpush1.bf16.msra.mxu0 0
        %316 = vmatprep.subr.bf16.mxu0 0
        %317 = vmatpush1.bf16.msra.mxu0 0
        %318 = vmatprep.subr.bf16.mxu0 0
        %319 = vmatpush1.bf16.msra.mxu0 0
        %320 = vmatprep.subr.bf16.mxu0 0
        %321 = vmatpush1.bf16.msra.mxu0 0
        %322 = vmatprep.subr.bf16.mxu0 0
        %323 = vmatpush1.bf16.msra.mxu0 0
        %324 = vmatprep.subr.bf16.mxu0 0
        %325 = vmatpush1.bf16.msra.mxu0 0
        %326 = vmatprep.subr.bf16.mxu0 0
        %327 = vmatpush1.bf16.msra.mxu0 0
        %328 = vmatprep.subr.bf16.mxu0 0
        %329 = vmatpush1.bf16.msra.mxu0 0
        %330 = vmatprep.subr.bf16.mxu0 0
        %331 = vmatpush1.bf16.msra.mxu0 0
        %332 = vmatprep.subr.bf16.mxu0 0
        %333 = vmatpush1.bf16.msra.mxu0 0
        %334 = vmatprep.subr.bf16.mxu0 0
        %335 = vmatpush1.bf16.msra.mxu0 0
        %336 = vmatprep.subr.bf16.mxu0 0
        %337 = vmatpush1.bf16.msra.mxu0 0
        %338 = vmatprep.subr.bf16.mxu0 0
        %339 = vmatpush1.bf16.msra.mxu0 0
        %340 = vmatprep.mubr.bf16.mxu0 0
        %341 = vmatmul.mubr.bf16.gmra.mrb[0].mxu0 %v306
        %v342 = vpop.f32.mrb[0].mxu0
        %v343 = vadd.f32 0.0, %v342
        %v344 = vpop.f32.mrb[0].mxu0
        %v345 = vpop.f32.mrb[0].mxu0
        %v346 = vadd.f32 0.0, %v345
        %v347 = vpop.f32.mrb[0].mxu0
        %348 = vdwg.mxu0
        %s349 = scalar_lea.vmem [#allocation5], 16
        %v350 = vld [vmem:[%s349] sm:$0xf]
        %v351 = vld [vmem:[%s349 + $0x4] sm:$0xf]
        %v352 = vld [vmem:[%s349 + $0x8] sm:$0xf]
        %v353 = vld [vmem:[%s349 + $0xc] sm:$0xf]
        %s354 = scalar_lea.vmem [#allocation5], 32
        %v355 = vld [vmem:[%s354] sm:$0xf]
        %v356 = vld [vmem:[%s354 + $0x4] sm:$0xf]
        %v357 = vld [vmem:[%s354 + $0x8] sm:$0xf]
        %v358 = vld [vmem:[%s354 + $0xc] sm:$0xf]
        %v363 = vunpack.c.l.b16 %v355
        %v364 = vunpack.c.l.b16 %v356
        %v365 = vunpack.c.l.b16 %v357
        %v366 = vunpack.c.l.b16 %v358
        %v367 = vpack.c.b16 %v364, %v363
        %v368 = vpack.c.b16 %v366, %v365
        %371 = vmatprep.subr.bf16.mxu0 0
        %372 = vmatpush1.bf16.msra.mxu0 %v367
        %373 = vmatprep.subr.bf16.mxu0 0
        %374 = vmatpush1.bf16.msra.mxu0 %v368
        %375 = vmatprep.subr.bf16.mxu0 0
        %376 = vmatpush1.bf16.msra.mxu0 0
        %377 = vmatprep.subr.bf16.mxu0 0
        %378 = vmatpush1.bf16.msra.mxu0 0
        %379 = vmatprep.subr.bf16.mxu0 0
        %380 = vmatpush1.bf16.msra.mxu0 0
        %381 = vmatprep.subr.bf16.mxu0 0
        %382 = vmatpush1.bf16.msra.mxu0 0
        %383 = vmatprep.subr.bf16.mxu0 0
        %384 = vmatpush1.bf16.msra.mxu0 0
        %385 = vmatprep.subr.bf16.mxu0 0
        %386 = vmatpush1.bf16.msra.mxu0 0
        %387 = vmatprep.subr.bf16.mxu0 0
        %388 = vmatpush1.bf16.msra.mxu0 0
        %389 = vmatprep.subr.bf16.mxu0 0
        %390 = vmatpush1.bf16.msra.mxu0 0
        %391 = vmatprep.subr.bf16.mxu0 0
        %392 = vmatpush1.bf16.msra.mxu0 0
        %393 = vmatprep.subr.bf16.mxu0 0
        %394 = vmatpush1.bf16.msra.mxu0 0
        %395 = vmatprep.subr.bf16.mxu0 0
        %396 = vmatpush1.bf16.msra.mxu0 0
        %397 = vmatprep.subr.bf16.mxu0 0
        %398 = vmatpush1.bf16.msra.mxu0 0
        %399 = vmatprep.subr.bf16.mxu0 0
        %400 = vmatpush1.bf16.msra.mxu0 0
        %401 = vmatprep.subr.bf16.mxu0 0
        %402 = vmatpush1.bf16.msra.mxu0 0
        %403 = vmatprep.mubr.bf16.mxu0 0
        %404 = vmatmul.mubr.bf16.gmra.mrb[0].mxu0 %v306
        %v405 = vpop.f32.mrb[0].mxu0
        %v406 = vadd.f32 0.0, %v405
        %v407 = vpop.f32.mrb[0].mxu0
        %v408 = vpop.f32.mrb[0].mxu0
        %v409 = vadd.f32 0.0, %v408
        %v410 = vpop.f32.mrb[0].mxu0
        %411 = vdwg.mxu0
        %v413 = vsel %vm304, %v279, 0
        %415 = vmatprep.subr.bf16.mxu0 0
        %416 = vmatpush1.bf16.msra.mxu0 %v300
        %417 = vmatprep.subr.bf16.mxu0 0
        %418 = vmatpush1.bf16.msra.mxu0 %v301
        %419 = vmatprep.subr.bf16.mxu0 0
        %420 = vmatpush1.bf16.msra.mxu0 0
        %421 = vmatprep.subr.bf16.mxu0 0
        %422 = vmatpush1.bf16.msra.mxu0 0
        %423 = vmatprep.subr.bf16.mxu0 0
        %424 = vmatpush1.bf16.msra.mxu0 0
        %425 = vmatprep.subr.bf16.mxu0 0
        %426 = vmatpush1.bf16.msra.mxu0 0
        %427 = vmatprep.subr.bf16.mxu0 0
        %428 = vmatpush1.bf16.msra.mxu0 0
        %429 = vmatprep.subr.bf16.mxu0 0
        %430 = vmatpush1.bf16.msra.mxu0 0
        %431 = vmatprep.subr.bf16.mxu0 0
        %432 = vmatpush1.bf16.msra.mxu0 0
        %433 = vmatprep.subr.bf16.mxu0 0
        %434 = vmatpush1.bf16.msra.mxu0 0
        %435 = vmatprep.subr.bf16.mxu0 0
        %436 = vmatpush1.bf16.msra.mxu0 0
        %437 = vmatprep.subr.bf16.mxu0 0
        %438 = vmatpush1.bf16.msra.mxu0 0
        %439 = vmatprep.subr.bf16.mxu0 0
        %440 = vmatpush1.bf16.msra.mxu0 0
        %441 = vmatprep.subr.bf16.mxu0 0
        %442 = vmatpush1.bf16.msra.mxu0 0
        %443 = vmatprep.subr.bf16.mxu0 0
        %444 = vmatpush1.bf16.msra.mxu0 0
        %445 = vmatprep.subr.bf16.mxu0 0
        %446 = vmatpush1.bf16.msra.mxu0 0
        %447 = vmatprep.mubr.bf16.mxu0 0
        %448 = vmatmul.mubr.bf16.gmra.mrb[0].mxu0 %v413
        %v449 = vpop.f32.mrb[0].mxu0
        %v450 = vadd.f32 0.0, %v449
        %v451 = vpop.f32.mrb[0].mxu0
        %v452 = vpop.f32.mrb[0].mxu0
        %v453 = vpop.f32.mrb[0].mxu0
        %454 = vdwg.mxu0
        %v457 = vunpack.c.l.s4 1966171168
        %v458 = vunpack.c.0.s8 %v457
        %v459 = vlaneseq
        %v460 = vshrl.u32 %v459, 7
        %v461 = vsub.s32 %v458, %v460
        %v462 = vrot.slane %v279, %v461
        %v464 = vunpack.c.l.s4 1966171168
        %v465 = vunpack.c.0.s8 %v464
        %v466 = vlaneseq
        %v467 = vshrl.u32 %v466, 7
        %v468 = vsub.s32 %v465, %v467
        %v469 = vrot.slane %v462, %v468
        %v471 = vshrl.u32 %v469, 16
        %v474 = vsel %vm304, %v471, 0
        %476 = vmatprep.subr.bf16.mxu0 0
        %477 = vmatpush1.bf16.msra.mxu0 %v367
        %478 = vmatprep.subr.bf16.mxu0 0
        %479 = vmatpush1.bf16.msra.mxu0 %v368
        %480 = vmatprep.subr.bf16.mxu0 0
        %481 = vmatpush1.bf16.msra.mxu0 0
        %482 = vmatprep.subr.bf16.mxu0 0
        %483 = vmatpush1.bf16.msra.mxu0 0
        %484 = vmatprep.subr.bf16.mxu0 0
        %485 = vmatpush1.bf16.msra.mxu0 0
        %486 = vmatprep.subr.bf16.mxu0 0
        %487 = vmatpush1.bf16.msra.mxu0 0
        %488 = vmatprep.subr.bf16.mxu0 0
        %489 = vmatpush1.bf16.msra.mxu0 0
        %490 = vmatprep.subr.bf16.mxu0 0
        %491 = vmatpush1.bf16.msra.mxu0 0
        %492 = vmatprep.subr.bf16.mxu0 0
        %493 = vmatpush1.bf16.msra.mxu0 0
        %494 = vmatprep.subr.bf16.mxu0 0
        %495 = vmatpush1.bf16.msra.mxu0 0
        %496 = vmatprep.subr.bf16.mxu0 0
        %497 = vmatpush1.bf16.msra.mxu0 0
        %498 = vmatprep.subr.bf16.mxu0 0
        %499 = vmatpush1.bf16.msra.mxu0 0
        %500 = vmatprep.subr.bf16.mxu0 0
        %501 = vmatpush1.bf16.msra.mxu0 0
        %502 = vmatprep.subr.bf16.mxu0 0
        %503 = vmatpush1.bf16.msra.mxu0 0
        %504 = vmatprep.subr.bf16.mxu0 0
        %505 = vmatpush1.bf16.msra.mxu0 0
        %506 = vmatprep.subr.bf16.mxu0 0
        %507 = vmatpush1.bf16.msra.mxu0 0
        %508 = vmatprep.mubr.bf16.mxu0 0
        %509 = vmatmul.mubr.bf16.gmra.mrb[0].mxu0 %v474
        %v510 = vpop.f32.mrb[0].mxu0
        %v511 = vadd.f32 0.0, %v510
        %v512 = vpop.f32.mrb[0].mxu0
        %v513 = vpop.f32.mrb[0].mxu0
        %v514 = vpop.f32.mrb[0].mxu0
        %515 = vdwg.mxu0
        %vm516 = vcmp.ge.s32.totalorder %v281, 1
        %vm517 = vcmp.ge.s32.totalorder %v282, 1
        %v518 = vrot.slane %v343, 7
        %v519 = vrot.slane %v346, 7
        %vm520 = vcmp.lt.s32.totalorder %v281, 1
        %v521 = vsel %vm520, %v518, %v519
        %v522 = vsel %vm520, %v519, %v518
        %v523 = vsel %vm516, 1, 0
        %v524 = vsel %vm517, 1, 0
        %vm525 = vcmp.eq.s32.totalorder %v523, 1
        %vm526 = vcmp.eq.s32.totalorder %v524, 1
        %v527 = vlaneseq
        %v528 = vshrl.u32 %v527, 7
        %v529 = vsub.s32 0, %v528
        %v530 = vrot.slane %v450, %v529
        %v531 = vsel %vm525, %v522, %v530
        %v532 = vsel %vm526, %v521, %v530
        %v537 = vunpack.c.l.b16 %v350
        %v538 = vunpack.c.l.b16 %v351
        %v539 = vunpack.c.l.b16 %v352
        %v540 = vunpack.c.l.b16 %v353
        %v541 = vpack.c.b16 %v538, %v537
        %v542 = vpack.c.b16 %v540, %v539
        %545 = vmatprep.subr.bf16.mxu0 0
        %546 = vmatpush1.bf16.msra.mxu0 %v541
        %547 = vmatprep.subr.bf16.mxu0 0
        %548 = vmatpush1.bf16.msra.mxu0 %v542
        %549 = vmatprep.subr.bf16.mxu0 0
        %550 = vmatpush1.bf16.msra.mxu0 0
        %551 = vmatprep.subr.bf16.mxu0 0
        %552 = vmatpush1.bf16.msra.mxu0 0
        %553 = vmatprep.subr.bf16.mxu0 0
        %554 = vmatpush1.bf16.msra.mxu0 0
        %555 = vmatprep.subr.bf16.mxu0 0
        %556 = vmatpush1.bf16.msra.mxu0 0
        %557 = vmatprep.subr.bf16.mxu0 0
        %558 = vmatpush1.bf16.msra.mxu0 0
        %559 = vmatprep.subr.bf16.mxu0 0
        %560 = vmatpush1.bf16.msra.mxu0 0
        %561 = vmatprep.subr.bf16.mxu0 0
        %562 = vmatpush1.bf16.msra.mxu0 0
        %563 = vmatprep.subr.bf16.mxu0 0
        %564 = vmatpush1.bf16.msra.mxu0 0
        %565 = vmatprep.subr.bf16.mxu0 0
        %566 = vmatpush1.bf16.msra.mxu0 0
        %567 = vmatprep.subr.bf16.mxu0 0
        %568 = vmatpush1.bf16.msra.mxu0 0
        %569 = vmatprep.subr.bf16.mxu0 0
        %570 = vmatpush1.bf16.msra.mxu0 0
        %571 = vmatprep.subr.bf16.mxu0 0
        %572 = vmatpush1.bf16.msra.mxu0 0
        %573 = vmatprep.subr.bf16.mxu0 0
        %574 = vmatpush1.bf16.msra.mxu0 0
        %575 = vmatprep.subr.bf16.mxu0 0
        %576 = vmatpush1.bf16.msra.mxu0 0
        %577 = vmatprep.mubr.bf16.mxu0 0
        %578 = vmatmul.mubr.bf16.gmra.mrb[0].mxu0 %v306
        %v579 = vpop.f32.mrb[0].mxu0
        %v580 = vadd.f32 %v531, %v579
        %v581 = vpop.f32.mrb[0].mxu0
        %v582 = vpop.f32.mrb[0].mxu0
        %v583 = vadd.f32 %v532, %v582
        %v584 = vpop.f32.mrb[0].mxu0
        %585 = vdwg.mxu0
        %vm586 = vcmp.lt.s32.totalorder %v281, 15
        %vm587 = vcmp.lt.s32.totalorder %v282, 15
        %v588 = vrot.slane %v406, 1
        %v589 = vrot.slane %v409, 1
        %vm590 = vcmp.lt.s32.totalorder %v281, 7
        %v591 = vsel %vm590, %v588, %v589
        %v592 = vsel %vm590, %v589, %v588
        %v593 = vsel %vm586, 1, 0
        %v594 = vsel %vm587, 1, 0
        %vm595 = vcmp.eq.s32.totalorder %v593, 1
        %vm596 = vcmp.eq.s32.totalorder %v594, 1
        %v597 = vlaneseq
        %v598 = vshrl.u32 %v597, 7
        %v599 = vsub.s32 0, %v598
        %v600 = vrot.slane %v511, %v599
        %v601 = vsel %vm595, %v591, %v600
        %v602 = vsel %vm596, %v592, %v600
        %v603 = vadd.f32 %v580, %v601
        %v604 = vadd.f32 %v583, %v602
        %v605 = vld [vmem:[%s3] sm:$0x1]
        %v607 = vlaneseq
        %v608 = vshrl.u32 %v607, 7
        %v609 = vsub.s32 0, %v608
        %v610 = vrot.slane %v605, %v609
        %v612 = vadd.f32 %v603, %v610
        %v613 = vadd.f32 %v604, %v610
        %v614 = vxor.u32 %v612, 2147483648
        %v615 = vxor.u32 %v613, 2147483648
        %v616 = vmul.f32 %v614, 1.442695
        %v617 = vpow.pop %v616
        %v618 = vmul.f32 %v615, 1.442695
        %v619 = vpow.pop %v618
        %v620 = vadd.f32 %v617, 1.0
        %v621 = vadd.f32 %v619, 1.0
        %v622 = vrcp.pop %v620
        %v623 = vmul.f32 1.0, %v622
        %v624 = vrcp.pop %v621
        %v625 = vmul.f32 1.0, %v624
        %628 = vrot.lane.b32.xlu0 %v623, 96
        %v629 = vpop.permute.xlu0 %628
        %630 = vrot.lane.b32.xlu0 %v625, 96
        %v631 = vpop.permute.xlu0 %630
        %v634 = vmul.f32 %v612, %v629
        %v635 = vmul.f32 %v613, %v631
        %v636 = vpack.c.bf16 %v635, %v634
        %v638 = vunpack.c.l.b16 %v636
        %v639 = vunpack.c.h.b16 %v636
        %v640 = vpack.c.b16 %v638, %v638
        %v641 = vpack.c.b16 %v639, %v639
        %vm644 = vcmask 257024
        %645 = vst.msk [vmem:[%s267] sm:$0xf] %vm644, %v640
        %646 = vst.msk [vmem:[%s267 + $0x4] sm:$0xf] %vm644, %v641
        %s647 = sand.u32 %s142, 1
        %s648 = scalar_lea.sflag [#allocation4], %s647
        %s649 = sand.u32 %s142, 1
        %s650 = smul.addr %s649, 8
        %s651 = scalar_lea.vmem [#allocation7], %s650
        // Predicated region
        $region45: #{tpu_custom_call.1} parent=35 // pred_check
          %p652 = pneg %p152
        $region46: #{tpu_custom_call.1} parent=35 // pred_check_branch
          %654 = sbr.rel (%p652) target = $region48
        $region47: #{tpu_custom_call.1} parent=35 // pred_region
          %s655 = smul.u32 2, %s27
          %s657 = ssub.s32 128, 128
          %658 = vsyncadd %s648, %s657
          %s659 = smul.addr %s26, 2
          %s660 = sadd.s32 %s655, %s659
          %s661 = smul.addr %s660, 64
          %s662 = scalar_lea.hbm %s4, %s661
          %s663 = sshll.u32 %s651, 4
          %s664 = int_to_ptr.vmem [resolvable:$true] %s663
          %669 = dma.vmem_to_hbm [thread:$0]  %s664, 128, %s662, %s648, 64, 64, 4
        $region48: #{tpu_custom_call.1} parent=35 // pred_fallthru
          _
      $region36: #{tpu_custom_call.1} parent=5 // pred_fallthru
        _
      %p670 = scmp.le.s32.totalorder 2, %s17
      // Predicated region
      $region49: #{tpu_custom_call.1} parent=5 // pred_check
        %p671 = pneg %p670
      $region50: #{tpu_custom_call.1} parent=5 // pred_check_branch
        %673 = sbr.rel (%p671) target = $region52
      $region51: #{tpu_custom_call.1} parent=5 // pred_region
        %s674 = ssub.s32 %s17, 2
        // Predicated region
        $region53: #{tpu_custom_call.1} parent=51 // pred_check
          %p675 = pneg %p158
        $region54: #{tpu_custom_call.1} parent=51 // pred_check_branch
          %677 = sbr.rel (%p675) target = $region56
        $region55: #{tpu_custom_call.1} parent=51 // pred_region
          %s678 = sand.u32 %s143, 1
          %s679 = scalar_lea.sflag [#allocation4], %s678
          %s680 = sand.u32 %s143, 1
          %s681 = smul.addr %s680, 8
          %s682 = scalar_lea.vmem [#allocation7], %s681
          %683 = dma.done %s679, 128
        $region56: #{tpu_custom_call.1} parent=51 // pred_fallthru
          _
      $region52: #{tpu_custom_call.1} parent=5 // pred_fallthru
        _
    $region6: #{tpu_custom_call.1} parent=1 // loop_footer
      %s21 = sadd.s32 1, %s17
    $region7: #{tpu_custom_call.1} parent=1 // loop_footer_branch
      %16 = sbr.rel target = $region3
    $region8: #{tpu_custom_call.1} parent=1 // loop_exit
      _
    %684 = vsyncpa [#allocation3], 1
    %s685 = scalar_lea.sflag [#allocation3], 1
    %686 = vsyncpa %s685, 1
    %687 = vsyncpa [#allocation6], 1
    %688 = vsyncpa [#allocation4], 1
    %s689 = scalar_lea.sflag [#allocation4], 1
    %690 = vsyncpa %s689, 1

</llo_original>
